<compile_context>
chip_gen: v6e
topology: v6e:2x2x1
jax: 0.10.0
libtpu: 0.0.40
codegen_flags: <defaults>
</compile_context>

<pallas_src>
import math

import jax
import jax.numpy as jnp
from jax import lax
from jax.experimental import pallas as pl
from jax.experimental.pallas import tpu as pltpu


# ----------------------------------------------------------------------------
# Tiled linear (MXU) kernel
# ----------------------------------------------------------------------------

def _matmul_kernel(x_ref, w_ref, o_ref, acc_ref):
    @pl.when(pl.program_id(2) == 0)
    def _():
        acc_ref[...] = jnp.zeros_like(acc_ref)

    acc_ref[...] += jnp.dot(x_ref[...], w_ref[...],
                            preferred_element_type=jnp.float32)

    @pl.when(pl.program_id(2) == pl.num_programs(2) - 1)
    def _():
        o_ref[...] = acc_ref[...].astype(o_ref.dtype)


def _pick_tile(dim, preferred, quantum):
    """Largest preferred tile that divides `dim` and respects TPU tiling quantum."""
    for t in preferred:
        if t % quantum == 0 and dim % t == 0:
            return t
    return dim  # fall back to full extent (always legal)


def linear(x2d, w):
    """y = x2d @ w   (x2d: [M, K], w: [K, N]; w already in (in, out) layout)."""
    M, K = x2d.shape
    K2, N = w.shape
    assert K == K2
    tm = _pick_tile(M, (512, 256, 128, 64, 32, 16, 8), 8)
    tn = _pick_tile(N, (256, 128), 128)
    tk = _pick_tile(K, (512, 256, 128), 128)
    grid = (M // tm, N // tn, K // tk)
    return pl.pallas_call(
        _matmul_kernel,
        out_shape=jax.ShapeDtypeStruct((M, N), x2d.dtype),
        grid=grid,
        in_specs=[
            pl.BlockSpec((tm, tk), lambda i, j, k: (i, k)),
            pl.BlockSpec((tk, tn), lambda i, j, k: (k, j)),
        ],
        out_specs=pl.BlockSpec((tm, tn), lambda i, j, k: (i, j)),
        scratch_shapes=[pltpu.VMEM((tm, tn), jnp.float32)],
        compiler_params=pltpu.CompilerParams(
            dimension_semantics=("parallel", "parallel", "arbitrary"),
            vmem_limit_bytes=32 * 1024 * 1024),
    )(x2d, w)


# ----------------------------------------------------------------------------
# Splat-attention kernel: one batch element per grid step, all heads in-kernel
# ----------------------------------------------------------------------------

def splat_attention(gate, qkv, traj, centers, c_sq, inv_denom, amps, num_heads):
    """gate: (1,) sigmoid(trajectory_gate); qkv: (B,S,3D); traj: (B,S,D);
    centers: (H,NS,Hd); c_sq / inv_denom / amps: (H,1,NS).  Returns (B,S,D)."""
    B, S, D3 = qkv.shape
    D = D3 // 3
    H = num_heads
    Hd = D // H
    NS = centers.shape[1]

    def kernel(gate_ref, qkv_ref, traj_ref, c_ref, csq_ref, idn_ref, amp_ref,
               o_ref):
        gate_s = gate_ref[0]  # scalar (SMEM)
        for h in range(H):
            lo = h * Hd
            q = qkv_ref[0, :, lo:lo + Hd]                     # (S, Hd)
            k = qkv_ref[0, :, D + lo:D + lo + Hd]             # (S, Hd)
            v = qkv_ref[0, :, 2 * D + lo:2 * D + lo + Hd]     # (S, Hd)
            t = traj_ref[0, :, lo:lo + Hd]                    # (S, Hd)
            centers_h = c_ref[h]                              # (NS, Hd)
            c_sq_h = csq_ref[h]                               # (1, NS)
            inv_den_h = idn_ref[h]                            # (1, NS)
            amps_h = amp_ref[h]                               # (1, NS)

            q_enh = q + gate_s * t
            k_enh = k + gate_s * t

            # ||x - c||^2 = ||x||^2 + ||c||^2 - 2 x.c   (MXU for the cross term)
            qc = lax.dot_general(q_enh, centers_h, (((1,), (1,)), ((), ())),
                                 preferred_element_type=jnp.float32)  # (S, NS)
            kc = lax.dot_general(k_enh, centers_h, (((1,), (1,)), ((), ())),
                                 preferred_element_type=jnp.float32)  # (S, NS)
            q_sq = jnp.sum(q_enh * q_enh, axis=-1, keepdims=True)     # (S, 1)
            k_sq = jnp.sum(k_enh * k_enh, axis=-1, keepdims=True)     # (S, 1)
            q_d = q_sq + c_sq_h - 2.0 * qc
            k_d = k_sq + c_sq_h - 2.0 * kc

            q_w = amps_h * jnp.exp(-0.5 * q_d * inv_den_h)            # (S, NS)
            k_w = amps_h * jnp.exp(-0.5 * k_d * inv_den_h)            # (S, NS)

            # scores[i, j] = sum_s q_w[i, s] * k_w[j, s]
            scores = lax.dot_general(q_w, k_w, (((1,), (1,)), ((), ())),
                                     preferred_element_type=jnp.float32)  # (S,S)

            # explicit stable softmax; reciprocal goes to the EUP slot
            m = jnp.max(scores, axis=-1, keepdims=True)
            p = jnp.exp(scores - m)
            l = jnp.sum(p, axis=-1, keepdims=True)
            probs = p * pl.reciprocal(l, approx=True)

            out_h = jnp.dot(probs, v, preferred_element_type=jnp.float32)
            o_ref[0, :, lo:lo + Hd] = out_h.astype(o_ref.dtype)

    return pl.pallas_call(
        kernel,
        out_shape=jax.ShapeDtypeStruct((B, S, D), jnp.float32),
        grid=(B,),
        in_specs=[
            pl.BlockSpec(memory_space=pltpu.MemorySpace.SMEM),       # gate
            pl.BlockSpec((1, S, 3 * D), lambda b: (b, 0, 0)),        # qkv
            pl.BlockSpec((1, S, D), lambda b: (b, 0, 0)),            # traj
            pl.BlockSpec((H, NS, Hd), lambda b: (0, 0, 0)),          # centers
            pl.BlockSpec((H, 1, NS), lambda b: (0, 0, 0)),           # ||c||^2
            pl.BlockSpec((H, 1, NS), lambda b: (0, 0, 0)),           # 1/(s^2+eps)
            pl.BlockSpec((H, 1, NS), lambda b: (0, 0, 0)),           # sigmoid(amp)
        ],
        out_specs=pl.BlockSpec((1, S, D), lambda b: (b, 0, 0)),
        compiler_params=pltpu.CompilerParams(
            dimension_semantics=("parallel",),
            vmem_limit_bytes=32 * 1024 * 1024),
    )(gate, qkv, traj, centers, c_sq, inv_denom, amps)


# ----------------------------------------------------------------------------
# Trajectory preprocessing: banded / windowed, O(B * S * window * D)
# ----------------------------------------------------------------------------

def compute_batch_trajectories(x, window_size):
    """Banded port of VectorizedTrajectoryComputer.compute_batch_trajectories."""
    B, S, D = x.shape
    if S < 2:
        return jnp.zeros_like(x)
    tv = x[:, 1:] - x[:, :-1]                                    # (B, S-1, D)
    mag = jnp.sqrt(jnp.sum(tv * tv, axis=-1, keepdims=True))     # (B, S-1, 1)
    ntr = tv / jnp.maximum(mag, 1e-8)                            # normalized deltas
    mw = jnp.tanh(mag[..., 0])                                   # (B, S-1)

    W = window_size
    ntr_pad = jnp.concatenate([jnp.zeros((B, W, D), ntr.dtype), ntr], axis=1)
    mw_pad = jnp.concatenate([jnp.zeros((B, W), mw.dtype), mw], axis=1)

    num = jnp.zeros((B, S, D), x.dtype)
    den = jnp.zeros((B, S), x.dtype)
    for d in range(W):                       # static, small window
        start = W - 1 - d                    # selects ntr[pos - 1 - d] (0 if OOB)
        n_d = ntr_pad[:, start:start + S]    # (B, S, D)
        w_d = mw_pad[:, start:start + S] * (1.0 / (1.0 + d))     # (B, S)
        num = num + w_d[..., None] * n_d
        den = den + w_d
    return num / jnp.maximum(den, 1e-8)[..., None]


# ----------------------------------------------------------------------------
# Params + forward
# ----------------------------------------------------------------------------

def init_params(key, model_dim, num_heads, num_splats, trajectory_strength=0.2):
    head_dim = model_dim // num_heads
    k1, k2, k3 = jax.random.split(key, 3)
    bound = 1.0 / math.sqrt(model_dim)
    # weights stored pre-transposed: (in_features, out_features)
    return {
        "w_qkv": jax.random.uniform(k1, (model_dim, 3 * model_dim),
                                    jnp.float32, -bound, bound),
        "w_out": jax.random.uniform(k2, (model_dim, model_dim),
                                    jnp.float32, -bound, bound),
        "splat_centers": 0.02 * jax.random.normal(
            k3, (num_heads, num_splats, head_dim), jnp.float32),
        "splat_log_scales": jnp.zeros((num_heads, num_splats), jnp.float32),
        "splat_amplitudes": jnp.ones((num_heads, num_splats), jnp.float32),
        "trajectory_gate": jnp.full((1,), trajectory_strength, jnp.float32),
    }


def trajectory_splat_attention_forward(x, params, num_heads, window_size):
    B, S, D = x.shape
    H = num_heads
    NS = params["splat_centers"].shape[1]

    traj = compute_batch_trajectories(x, window_size)            # (B, S, D)

    qkv = linear(x.reshape(B * S, D), params["w_qkv"]).reshape(B, S, 3 * D)

    # tiny per-parameter transforms precomputed once (O(H*NS))
    gate = jax.nn.sigmoid(params["trajectory_gate"])             # (1,)
    scales = jnp.exp(params["splat_log_scales"])                 # (H, NS)
    inv_denom = (1.0 / (scales * scales + 1e-8)).reshape(H, 1, NS)
    amps = jax.nn.sigmoid(params["splat_amplitudes"]).reshape(H, 1, NS)
    c_sq = jnp.sum(params["splat_centers"] ** 2, axis=-1).reshape(H, 1, NS)

    attn = splat_attention(gate, qkv, traj, params["splat_centers"],
                           c_sq, inv_denom, amps, num_heads)     # (B, S, D)

    out = linear(attn.reshape(B * S, D), params["w_out"]).reshape(B, S, D)
    return out


# ----------------------------------------------------------------------------
# Pure-JAX reference (dense formulation, mirrors the PyTorch module)
# ----------------------------------------------------------------------------

def _reference_trajectories_dense(x, window_size):
    B, S, D = x.shape
    if S < 2:
        return jnp.zeros_like(x)
    tv = x[:, 1:] - x[:, :-1]
    mag = jnp.sqrt(jnp.sum(tv * tv, axis=-1, keepdims=True))
    ntr = tv / jnp.maximum(mag, 1e-8)
    mw = jnp.tanh(mag[..., 0])
    pos = jnp.arange(S, dtype=jnp.int32)[:, None]
    j = jnp.arange(S - 1, dtype=jnp.int32)[None, :]
    mask = (j >= jnp.maximum(0, pos - window_size)) & (j < pos)
    dw = 1.0 / (1.0 + jnp.abs(j.astype(jnp.float32)
                              - pos.astype(jnp.float32) + 1.0))
    Wm = mw[:, None, :] * (dw * mask)[None]
    Wsum = jnp.maximum(jnp.sum(Wm, axis=-1, keepdims=True), 1e-8)
    return jnp.einsum('bpj,bjd->bpd', Wm / Wsum, ntr)


def reference_forward(x, params, num_heads, window_size):
    B, S, D = x.shape
    H = num_heads
    Hd = D // H
    traj = _reference_trajectories_dense(x, window_size)
    qkv = x @ params["w_qkv"]
    q, k, v = jnp.split(qkv, 3, axis=-1)
    to_heads = lambda t: t.reshape(B, S, H, Hd).transpose(0, 2, 1, 3)
    q, k, v = to_heads(q), to_heads(k), to_heads(v)
    traj_h = to_heads(traj)
    gate = jax.nn.sigmoid(params["trajectory_gate"])[0]
    qe = q + gate * traj_h
    ke = k + gate * traj_h
    centers = params["splat_centers"][None, :, None, :, :]          # (1,H,1,NS,Hd)
    scales = jnp.exp(params["splat_log_scales"])[None, :, None, :]  # (1,H,1,NS)
    amps = jax.nn.sigmoid(params["splat_amplitudes"])[None, :, None, :]
    qd = jnp.sum((qe[..., None, :] - centers) ** 2, axis=-1)
    kd = jnp.sum((ke[..., None, :] - centers) ** 2, axis=-1)
    qw = amps * jnp.exp(-0.5 * qd / (scales ** 2 + 1e-8))
    kw = amps * jnp.exp(-0.5 * kd / (scales ** 2 + 1e-8))
    attn = jnp.einsum('bhis,bhjs->bhij', qw, kw)
    probs = jax.nn.softmax(attn, axis=-1)
    out = jnp.einsum('bhij,bhjd->bhid', probs, v)
    out = out.transpose(0, 2, 1, 3).reshape(B, S, D)
    return out @ params["w_out"]


# ----------------------------------------------------------------------------

if __name__ == "__main__":
    B, S, D = 2, 16, 64
    num_heads, num_splats, window_size = 4, 8, 8

    key = jax.random.PRNGKey(0)
    kx, kp = jax.random.split(key)
    x = jax.random.normal(kx, (B, S, D), jnp.float32)
    params = init_params(kp, D, num_heads, num_splats, trajectory_strength=0.2)

    out = trajectory_splat_attention_forward(x, params, num_heads, window_size)
    out = jax.block_until_ready(out)

    ref = reference_forward(x, params, num_heads, window_size)
    assert out.shape == (B, S, D)
    assert jnp.allclose(out, ref, atol=2e-2, rtol=2e-2)

    print("KERNEL_OK")
</pallas_src>

<mosaic_0001>
module attributes {stable_mosaic.version = 11 : i64} {
  func.func @_matmul_kernel(%arg0: i32, %arg1: i32, %arg2: i32, %arg3: memref<32x64xf32, #tpu.memory_space<vmem>>, %arg4: memref<64x192xf32, #tpu.memory_space<vmem>>, %arg5: memref<32x192xf32, #tpu.memory_space<vmem>>, %arg6: memref<32x192xf32, #tpu.memory_space<vmem>>) attributes {dimension_semantics = [#tpu.dimension_semantics<parallel>, #tpu.dimension_semantics<parallel>, #tpu.dimension_semantics<arbitrary>], iteration_bounds = array<i64: 1, 1, 1>, scalar_prefetch = 0 : i64, scratch_operands = 1 : i64, tpu.core_type = #tpu.core_type<tc>, window_params = [{transform_indices = @transform_0, window_bounds = array<i64: 32, 64>}, {transform_indices = @transform_1, window_bounds = array<i64: 64, 192>}, {transform_indices = @transform_2, window_bounds = array<i64: 32, 192>}]} {
    %c0_i32 = arith.constant 0 : i32
    %0 = arith.cmpi eq, %arg2, %c0_i32 : i32
    %1 = arith.extui %0 : i1 to i32
    %c0_i32_0 = arith.constant 0 : i32
    %2 = arith.cmpi ne, %1, %c0_i32_0 : i32
    scf.if %2 {
      %cst_10 = arith.constant 0.000000e+00 : f32
      %12 = vector.broadcast %cst_10 : f32 to vector<32x192xf32>
      %c0_11 = arith.constant 0 : index
      %c0_12 = arith.constant 0 : index
      %13 = vector.load %arg6[%c0_11, %c0_12] : memref<32x192xf32, #tpu.memory_space<vmem>>, vector<32x192xf32>
      tpu.vector_store %arg6[%c0_11, %c0_12], %12 {strides = array<i32>} : memref<32x192xf32, #tpu.memory_space<vmem>>, vector<32x192xf32>,
    } else {
    }
    %c0 = arith.constant 0 : index
    %c0_1 = arith.constant 0 : index
    %3 = vector.load %arg6[%c0, %c0_1] : memref<32x192xf32, #tpu.memory_space<vmem>>, vector<32x192xf32>
    %c0_2 = arith.constant 0 : index
    %c0_3 = arith.constant 0 : index
    %4 = vector.load %arg3[%c0_2, %c0_3] : memref<32x64xf32, #tpu.memory_space<vmem>>, vector<32x64xf32>
    %c0_4 = arith.constant 0 : index
    %c0_5 = arith.constant 0 : index
    %5 = vector.load %arg4[%c0_4, %c0_5] : memref<64x192xf32, #tpu.memory_space<vmem>>, vector<64x192xf32>
    %cst = arith.constant dense<0.000000e+00> : vector<32x192xf32>
    %6 = tpu.matmul %4, %5, %cst {dimension_numbers = #tpu.dot_dimension_numbers<[1], [0], [0], [1], [0, 0, 1, 1], [], []>} : vector<32x64xf32>, vector<64x192xf32>, vector<32x192xf32> -> vector<32x192xf32>
    %7 = arith.addf %3, %6 : vector<32x192xf32>
    %c0_6 = arith.constant 0 : index
    %c0_7 = arith.constant 0 : index
    %8 = vector.load %arg6[%c0_6, %c0_7] : memref<32x192xf32, #tpu.memory_space<vmem>>, vector<32x192xf32>
    tpu.vector_store %arg6[%c0_6, %c0_7], %7 {strides = array<i32>} : memref<32x192xf32, #tpu.memory_space<vmem>>, vector<32x192xf32>,
    %c0_i32_8 = arith.constant 0 : i32
    %9 = arith.cmpi eq, %arg2, %c0_i32_8 : i32
    %10 = arith.extui %9 : i1 to i32
    %c0_i32_9 = arith.constant 0 : i32
    %11 = arith.cmpi ne, %10, %c0_i32_9 : i32
    scf.if %11 {
      %c0_10 = arith.constant 0 : index
      %c0_11 = arith.constant 0 : index
      %12 = vector.load %arg6[%c0_10, %c0_11] : memref<32x192xf32, #tpu.memory_space<vmem>>, vector<32x192xf32>
      %c0_12 = arith.constant 0 : index
      %c0_13 = arith.constant 0 : index
      %13 = vector.load %arg5[%c0_12, %c0_13] : memref<32x192xf32, #tpu.memory_space<vmem>>, vector<32x192xf32>
      tpu.vector_store %arg5[%c0_12, %c0_13], %12 {strides = array<i32>} : memref<32x192xf32, #tpu.memory_space<vmem>>, vector<32x192xf32>,
    } else {
    }
    return
  }
  func.func @transform_0(%arg0: i32, %arg1: i32, %arg2: i32) -> (i32, i32) {
    %c0_i32 = arith.constant 0 : i32
    return %arg0, %arg2 : i32, i32
  }
  func.func @transform_1(%arg0: i32, %arg1: i32, %arg2: i32) -> (i32, i32) {
    %c0_i32 = arith.constant 0 : i32
    return %arg2, %arg1 : i32, i32
  }
  func.func @transform_2(%arg0: i32, %arg1: i32, %arg2: i32) -> (i32, i32) {
    %c0_i32 = arith.constant 0 : i32
    return %arg0, %arg1 : i32, i32
  }
}

</mosaic_0001>

<llo_original>
// kernel: tpu_custom_call.1
$region0: #{tpu_custom_call.1}
  #allocation0 [shape = 'u32[]', space=smem, size = 0x4, offset = 0x4, fixed_abs, tag = 'smem constant byte address 0x4 - core index']
  #allocation1 [shape = 'u32[144,128]{1,0:T(1,128)}', space=vmem, size = 0x12000, scoped, tag = 'internal scratch']
  #allocation2 [shape = 'f32[32,192]{1,0:T(8,128)}', space=vmem, size = 0x8000, scoped, tag = 'scratch operand']
  %s0 = inlined_call_operand.hbm [shape: f32[32,64], index: 0, kind: input, shape index: {}]
  %s1 = inlined_call_operand.hbm [shape: f32[64,192], index: 1, kind: input, shape index: {}]
  %s2 = inlined_call_operand.hbm [shape: f32[32,192], index: 2, kind: output, shape index: {}]
  %s3 = sld [smem:[#allocation0]]
  $region34: #{tpu_custom_call.1} parent=0
    _
  %s5 = ssub.s32 1, %s3
  %s6 = scalar_select 0, %s5, %s3
  $region1: #{tpu_custom_call.1} parent=0
    #allocation3 [shape = 'u8[16384]{0}', space=vmem, size = 0x4000, scoped, tag = 'input window, operand 0, single buffered']
    #allocation4 [shape = 's32[1]{0}', space=sflag, size = 0x4, scoped, tag = 'scoped memory for tpu_custom_call.1']
    #allocation5 [shape = 's32[1]{0}', space=sflag, size = 0x4, scoped, tag = 'scoped memory for tpu_custom_call.1']
    #allocation6 [shape = 'u8[65536]{0}', space=vmem, size = 0x10000, scoped, tag = 'input window, operand 1, single buffered']
    #allocation7 [shape = 's32[1]{0}', space=sflag, size = 0x4, scoped, tag = 'scoped memory for tpu_custom_call.1']
    #allocation8 [shape = 'u8[32768]{0}', space=vmem, size = 0x8000, scoped, tag = 'output window, operand 0, single buffered']
    %7 = vsyncpa [#allocation4], 0
    %8 = vsyncpa [#allocation7], 0
    %9 = vsyncpa [#allocation5], 0
    // Predicated region
    $region2: #{tpu_custom_call.1} parent=1 // pred_check
      _
    $region3: #{tpu_custom_call.1} parent=1 // pred_check_branch
      %11 = sbr.rel (0) target = $region5
    $region4: #{tpu_custom_call.1} parent=1 // pred_region
      %s13 = ssub.s32 512, 512
      %14 = vsyncadd [#allocation4], %s13
      %s15 = sshll.u32 [#allocation3], 4
      %s16 = int_to_ptr.vmem [resolvable:$true] %s15
      %21 = dma.hbm_to_vmem [thread:$0]  %s0, 512, %s16, [#allocation4], 128, 128, 8
    $region5: #{tpu_custom_call.1} parent=1 // pred_fallthru
      _
    // Predicated region
    $region6: #{tpu_custom_call.1} parent=1 // pred_check
      _
    $region7: #{tpu_custom_call.1} parent=1 // pred_check_branch
      %23 = sbr.rel (0) target = $region9
    $region8: #{tpu_custom_call.1} parent=1 // pred_region
      %s25 = ssub.s32 2048, 2048
      %26 = vsyncadd [#allocation7], %s25
      %s27 = sshll.u32 [#allocation6], 4
      %s28 = int_to_ptr.vmem [resolvable:$true] %s27
      %33 = dma.hbm_to_vmem [thread:$0]  %s1, 2048, %s28, [#allocation7], 256, 256, 16
    $region9: #{tpu_custom_call.1} parent=1 // pred_fallthru
      _
    // Predicated region
    $region10: #{tpu_custom_call.1} parent=1 // pred_check
      _
    $region11: #{tpu_custom_call.1} parent=1 // pred_check_branch
      %35 = sbr.rel (0) target = $region13
    $region12: #{tpu_custom_call.1} parent=1 // pred_region
      %36 = dma.done [#allocation4], 512
    $region13: #{tpu_custom_call.1} parent=1 // pred_fallthru
      _
    // Predicated region
    $region14: #{tpu_custom_call.1} parent=1 // pred_check
      _
    $region15: #{tpu_custom_call.1} parent=1 // pred_check_branch
      %38 = sbr.rel (0) target = $region17
    $region16: #{tpu_custom_call.1} parent=1 // pred_region
      %39 = dma.done [#allocation7], 2048
    $region17: #{tpu_custom_call.1} parent=1 // pred_fallthru
      _
    %p40 = scmp.eq.s32.totalorder 0, 0
    // Predicated region
    $region18: #{tpu_custom_call.1} parent=1 // pred_check
      %p41 = pneg %p40
    $region19: #{tpu_custom_call.1} parent=1 // pred_check_branch
      %43 = sbr.rel (%p41) target = $region21
    $region20: #{tpu_custom_call.1} parent=1 // pred_region
      %44 = vst [vmem:[#allocation2] sm:$0xff] 0.0
      %vm45 = vcmask 523264
      %46 = vst.msk [vmem:[#allocation2 + $0x8] sm:$0xff] %vm45, 0.0
      %47 = vst [vmem:[#allocation2 + $0x10] sm:$0xff] 0.0
      %48 = vst.msk [vmem:[#allocation2 + $0x18] sm:$0xff] %vm45, 0.0
      %49 = vst [vmem:[#allocation2 + $0x20] sm:$0xff] 0.0
      %50 = vst.msk [vmem:[#allocation2 + $0x28] sm:$0xff] %vm45, 0.0
      %51 = vst [vmem:[#allocation2 + $0x30] sm:$0xff] 0.0
      %52 = vst.msk [vmem:[#allocation2 + $0x38] sm:$0xff] %vm45, 0.0
    $region21: #{tpu_custom_call.1} parent=1 // pred_fallthru
      _
    %v53 = vld [vmem:[#allocation2] sm:$0xff]
    %v54 = vld [vmem:[#allocation2 + $0x8] sm:$0xff]
    %v55 = vld [vmem:[#allocation2 + $0x10] sm:$0xff]
    %v56 = vld [vmem:[#allocation2 + $0x18] sm:$0xff]
    %v57 = vld [vmem:[#allocation2 + $0x20] sm:$0xff]
    %v58 = vld [vmem:[#allocation2 + $0x28] sm:$0xff]
    %v59 = vld [vmem:[#allocation2 + $0x30] sm:$0xff]
    %v60 = vld [vmem:[#allocation2 + $0x38] sm:$0xff]
    %v61 = vld [vmem:[#allocation3] sm:$0xff]
    %v62 = vld [vmem:[#allocation3 + $0x8] sm:$0xff]
    %v63 = vld [vmem:[#allocation3 + $0x10] sm:$0xff]
    %v64 = vld [vmem:[#allocation3 + $0x18] sm:$0xff]
    %v65 = vld [vmem:[#allocation6] sm:$0xff]
    %v66 = vld [vmem:[#allocation6 + $0x8] sm:$0xff]
    %v67 = vld [vmem:[#allocation6 + $0x10] sm:$0xff]
    %v68 = vld [vmem:[#allocation6 + $0x18] sm:$0xff]
    %v69 = vld [vmem:[#allocation6 + $0x20] sm:$0xff]
    %v70 = vld [vmem:[#allocation6 + $0x28] sm:$0xff]
    %v71 = vld [vmem:[#allocation6 + $0x30] sm:$0xff]
    %v72 = vld [vmem:[#allocation6 + $0x38] sm:$0xff]
    %v73 = vld [vmem:[#allocation6 + $0x40] sm:$0xff]
    %v74 = vld [vmem:[#allocation6 + $0x48] sm:$0xff]
    %v75 = vld [vmem:[#allocation6 + $0x50] sm:$0xff]
    %v76 = vld [vmem:[#allocation6 + $0x58] sm:$0xff]
    %v77 = vld [vmem:[#allocation6 + $0x60] sm:$0xff]
    %v78 = vld [vmem:[#allocation6 + $0x68] sm:$0xff]
    %v79 = vld [vmem:[#allocation6 + $0x70] sm:$0xff]
    %v80 = vld [vmem:[#allocation6 + $0x78] sm:$0xff]
    %vm81 = vcmask 523264
    %v83 = vsel %vm81, %v61, 0
    %v86 = vsel %vm81, %v62, 0
    %v89 = vsel %vm81, %v63, 0
    %v92 = vsel %vm81, %v64, 0
    %94 = vmatprep.subr.mxu0 0.0
    %95 = vmatpush1.msra.mxu0 0.0
    %96 = vmatprep.subr.mxu0 0.0
    %97 = vmatpush1.msra.mxu0 0.0
    %98 = vmatprep.subr.mxu0 0.0
    %99 = vmatpush1.msra.mxu0 0.0
    %100 = vmatprep.subr.mxu0 0.0
    %101 = vmatpush1.msra.mxu0 0.0
    %102 = vmatprep.subr.mxu0 0.0
    %103 = vmatpush1.msra.mxu0 0.0
    %104 = vmatprep.subr.mxu0 0.0
    %105 = vmatpush1.msra.mxu0 0.0
    %106 = vmatprep.subr.mxu0 0.0
    %107 = vmatpush1.msra.mxu0 0.0
    %108 = vmatprep.subr.mxu0 0.0
    %109 = vmatpush1.msra.mxu0 0.0
    %110 = vmatprep.subr.mxu0 %v80
    %111 = vmatpush1.msra.mxu0 %v79
    %112 = vmatprep.subr.mxu0 %v78
    %113 = vmatpush1.msra.mxu0 %v77
    %114 = vmatprep.subr.mxu0 %v76
    %115 = vmatpush1.msra.mxu0 %v75
    %116 = vmatprep.subr.mxu0 %v74
    %117 = vmatpush1.msra.mxu0 %v73
    %118 = vmatprep.subr.mxu0 %v72
    %119 = vmatpush1.msra.mxu0 %v71
    %120 = vmatprep.subr.mxu0 %v70
    %121 = vmatpush1.msra.mxu0 %v69
    %122 = vmatprep.subr.mxu0 %v68
    %123 = vmatpush1.msra.mxu0 %v67
    %124 = vmatprep.subr.mxu0 %v66
    %125 = vmatpush1.msra.mxu0 %v65
    %126 = vmatprep.subr.mxu0 0.0
    %127 = vmatpush2.msra.mxu0 0.0
    %128 = vmatprep.subr.mxu0 0.0
    %129 = vmatpush2.msra.mxu0 0.0
    %130 = vmatprep.subr.mxu0 0.0
    %131 = vmatpush2.msra.mxu0 0.0
    %132 = vmatprep.subr.mxu0 0.0
    %133 = vmatpush2.msra.mxu0 0.0
    %134 = vmatprep.subr.mxu0 0.0
    %135 = vmatpush2.msra.mxu0 0.0
    %136 = vmatprep.subr.mxu0 0.0
    %137 = vmatpush2.msra.mxu0 0.0
    %138 = vmatprep.subr.mxu0 0.0
    %139 = vmatpush2.msra.mxu0 0.0
    %140 = vmatprep.subr.mxu0 0.0
    %141 = vmatpush2.msra.mxu0 0.0
    %142 = vmatprep.subr.mxu0 0.0
    %143 = vmatpush2.msra.mxu0 0.0
    %144 = vmatprep.subr.mxu0 0.0
    %145 = vmatpush2.msra.mxu0 0.0
    %146 = vmatprep.subr.mxu0 0.0
    %147 = vmatpush2.msra.mxu0 0.0
    %148 = vmatprep.subr.mxu0 0.0
    %149 = vmatpush2.msra.mxu0 0.0
    %150 = vmatprep.subr.mxu0 0.0
    %151 = vmatpush2.msra.mxu0 0.0
    %152 = vmatprep.subr.mxu0 0.0
    %153 = vmatpush2.msra.mxu0 0.0
    %154 = vmatprep.subr.mxu0 0.0
    %155 = vmatpush2.msra.mxu0 0.0
    %156 = vmatprep.subr.mxu0 0.0
    %157 = vmatpush2.msra.mxu0 0.0
    %158 = vmatprep.mubr.f32.mxu0 0.0
    %159 = vmatmul.mubr.f32.gmra.mxu0 %v83
    %v160 = vpop.f32.mrf.mxu0
    %v161 = vadd.f32 0.0, %v160
    %v162 = vpop.f32.mrf.mxu0
    %v163 = vadd.f32 0.0, %v162
    %164 = vmatprep.mubr.f32.mxu0 0.0
    %165 = vmatmul.mubr.f32.gmra.mxu0 %v86
    %v166 = vpop.f32.mrf.mxu0
    %v167 = vadd.f32 0.0, %v166
    %v168 = vpop.f32.mrf.mxu0
    %v169 = vadd.f32 0.0, %v168
    %170 = vmatprep.mubr.f32.mxu0 0.0
    %171 = vmatmul.mubr.f32.gmra.mxu0 %v89
    %v172 = vpop.f32.mrf.mxu0
    %v173 = vadd.f32 0.0, %v172
    %v174 = vpop.f32.mrf.mxu0
    %v175 = vadd.f32 0.0, %v174
    %176 = vmatprep.mubr.f32.mxu0 0.0
    %177 = vmatmul.mubr.f32.gmra.mxu0 %v92
    %v178 = vpop.f32.mrf.mxu0
    %v179 = vadd.f32 0.0, %v178
    %v180 = vpop.f32.mrf.mxu0
    %v181 = vadd.f32 0.0, %v180
    %182 = vdwg.mxu0
    %v183 = vadd.f32 %v53, %v161
    %v184 = vadd.f32 %v54, %v163
    %v185 = vadd.f32 %v55, %v167
    %v186 = vadd.f32 %v56, %v169
    %v187 = vadd.f32 %v57, %v173
    %v188 = vadd.f32 %v58, %v175
    %v189 = vadd.f32 %v59, %v179
    %v190 = vadd.f32 %v60, %v181
    %191 = vst [vmem:[#allocation2] sm:$0xff] %v183
    %192 = vst.msk [vmem:[#allocation2 + $0x8] sm:$0xff] %vm81, %v184
    %193 = vst [vmem:[#allocation2 + $0x10] sm:$0xff] %v185
    %194 = vst.msk [vmem:[#allocation2 + $0x18] sm:$0xff] %vm81, %v186
    %195 = vst [vmem:[#allocation2 + $0x20] sm:$0xff] %v187
    %196 = vst.msk [vmem:[#allocation2 + $0x28] sm:$0xff] %vm81, %v188
    %197 = vst [vmem:[#allocation2 + $0x30] sm:$0xff] %v189
    %198 = vst.msk [vmem:[#allocation2 + $0x38] sm:$0xff] %vm81, %v190
    // Predicated region
    $region22: #{tpu_custom_call.1} parent=1 // pred_check
      %p199 = pneg %p40
    $region23: #{tpu_custom_call.1} parent=1 // pred_check_branch
      %201 = sbr.rel (%p199) target = $region25
    $region24: #{tpu_custom_call.1} parent=1 // pred_region
      %v202 = vld [vmem:[#allocation2] sm:$0xff]
      %v203 = vld [vmem:[#allocation2 + $0x8] sm:$0xff]
      %v204 = vld [vmem:[#allocation2 + $0x10] sm:$0xff]
      %v205 = vld [vmem:[#allocation2 + $0x18] sm:$0xff]
      %v206 = vld [vmem:[#allocation2 + $0x20] sm:$0xff]
      %v207 = vld [vmem:[#allocation2 + $0x28] sm:$0xff]
      %v208 = vld [vmem:[#allocation2 + $0x30] sm:$0xff]
      %v209 = vld [vmem:[#allocation2 + $0x38] sm:$0xff]
      %210 = vst [vmem:[#allocation8] sm:$0xff] %v202
      %211 = vst.msk [vmem:[#allocation8 + $0x8] sm:$0xff] %vm81, %v203
      %212 = vst [vmem:[#allocation8 + $0x10] sm:$0xff] %v204
      %213 = vst.msk [vmem:[#allocation8 + $0x18] sm:$0xff] %vm81, %v205
      %214 = vst [vmem:[#allocation8 + $0x20] sm:$0xff] %v206
      %215 = vst.msk [vmem:[#allocation8 + $0x28] sm:$0xff] %vm81, %v207
      %216 = vst [vmem:[#allocation8 + $0x30] sm:$0xff] %v208
      %217 = vst.msk [vmem:[#allocation8 + $0x38] sm:$0xff] %vm81, %v209
    $region25: #{tpu_custom_call.1} parent=1 // pred_fallthru
      _
    // Predicated region
    $region26: #{tpu_custom_call.1} parent=1 // pred_check
      _
    $region27: #{tpu_custom_call.1} parent=1 // pred_check_branch
      %219 = sbr.rel (0) target = $region29
    $region28: #{tpu_custom_call.1} parent=1 // pred_region
      %s221 = ssub.s32 1024, 1024
      %222 = vsyncadd [#allocation5], %s221
      %s223 = sshll.u32 [#allocation8], 4
      %s224 = int_to_ptr.vmem [resolvable:$true] %s223
      %229 = dma.vmem_to_hbm [thread:$0]  %s224, 1024, %s2, [#allocation5], 256, 256, 16
    $region29: #{tpu_custom_call.1} parent=1 // pred_fallthru
      _
    // Predicated region
    $region30: #{tpu_custom_call.1} parent=1 // pred_check
      _
    $region31: #{tpu_custom_call.1} parent=1 // pred_check_branch
      %231 = sbr.rel (0) target = $region33
    $region32: #{tpu_custom_call.1} parent=1 // pred_region
      %232 = dma.done [#allocation5], 1024
    $region33: #{tpu_custom_call.1} parent=1 // pred_fallthru
      _
    %233 = vsyncpa [#allocation4], 1
    %234 = vsyncpa [#allocation7], 1
    %235 = vsyncpa [#allocation5], 1

</llo_original>
